<compile_context>
chip_gen: v6e
topology: v6e:2x2x1
jax: 0.10.0
libtpu: 0.0.40
codegen_flags: <defaults>
</compile_context>

<pallas_src>
import functools

import jax
import jax.numpy as jnp
from jax.experimental import pallas as pl
from jax.experimental.pallas import tpu as pltpu


def resblock_kernel(x_ref, w1_ref, b1_ref, w2_ref, b2_ref, mask_ref, out_ref,
                    *, K, Wp, N):
    """Fused ResBlock for one batch element.

    x_ref   : (1, C, N)    zero-padded input, flattened Hp*Wp -> N lanes (VMEM)
    w*_ref  : (C, K*K*C)   conv weights; rows = out channel, cols = (kh, kw, ci)
    b*_ref  : (C, 1)       conv biases
    mask_ref: (1, N)       1.0 on interior pixels, 0.0 on pad ring / lane tail
    out_ref : (1, C, N)    conv2 + residual, same padded-flat layout
    """
    xf = x_ref[0]                # (C, N)
    mask = mask_ref[...]         # (1, N)
    pad = K // 2
    # A conv tap (kh, kw) is a constant shift in padded-flat coordinates.
    deltas = [(kh - pad) * Wp + (kw - pad) for kh in range(K) for kw in range(K)]

    def shift(v, d):
        # y[:, q] = v[:, q + d] for every q the interior ever reads
        # (wrap-around junk only lands on discarded ring positions).
        # Pure lane rotation -> XLU, no windowed slice+reshape copies.
        if d == 0:
            return v
        s = d % N
        return jnp.concatenate([v[:, s:], v[:, :s]], axis=1)

    def conv(src, w_ref, b_ref):
        # im2col operand (K*K*C, N): one lane-dense MXU matmul per conv.
        patches = jnp.concatenate([shift(src, d) for d in deltas], axis=0)
        y = jnp.dot(w_ref[...], patches, preferred_element_type=jnp.float32)
        return y + b_ref[...]     # (C, N) + (C, 1) lane-broadcast

    # conv1 -> bias -> ReLU, then zero the padding ring so conv2 sees
    # proper zero padding (replaces the old padded scratch + zero fill).
    act = jnp.maximum(conv(xf, w1_ref, b1_ref), 0.0) * mask
    # conv2 -> bias -> residual (padded input already resident, whole tile).
    out_ref[0] = (conv(act, w2_ref, b2_ref) + xf).astype(out_ref.dtype)


def resblock_forward(x_nchw, w1, b1, w2, b2, ksize=3):
    """x_nchw: (B, C, H, W) float32; weights in torch OIHW layout."""
    B, C, H, W = x_nchw.shape
    pad = ksize // 2
    Hp, Wp = H + 2 * pad, W + 2 * pad
    HWp = Hp * Wp
    Npad = ((HWp + 127) // 128) * 128          # lane-dense flat length

    # ---- wrapper glue: padding / flattening / weight repacking (pure XLA) ----
    xp = jnp.pad(x_nchw, ((0, 0), (0, 0), (pad, pad), (pad, pad)))   # (B,C,Hp,Wp)
    xf = jnp.pad(xp.reshape(B, C, HWp),
                 ((0, 0), (0, 0), (0, Npad - HWp)))                  # (B,C,Npad)

    # OIHW -> (O, KH, KW, I) -> (C_out, K*K*C_in), matching im2col row order.
    kkc = ksize * ksize * C
    w1m = jnp.transpose(w1, (0, 2, 3, 1)).reshape(C, kkc)
    w2m = jnp.transpose(w2, (0, 2, 3, 1)).reshape(C, kkc)
    b1c = b1.reshape(C, 1)
    b2c = b2.reshape(C, 1)

    # Interior mask: 1 on real pixels, 0 on the pad ring and the lane tail.
    mask2 = jnp.zeros((Hp, Wp), x_nchw.dtype).at[pad:pad + H, pad:pad + W].set(1.0)
    maskf = jnp.pad(mask2.reshape(1, HWp), ((0, 0), (0, Npad - HWp)))

    kernel = functools.partial(resblock_kernel, K=ksize, Wp=Wp, N=Npad)

    outf = pl.pallas_call(
        kernel,
        out_shape=jax.ShapeDtypeStruct((B, C, Npad), x_nchw.dtype),
        grid_spec=pltpu.PrefetchScalarGridSpec(
            num_scalar_prefetch=0,
            grid=(B,),
            in_specs=[
                pl.BlockSpec((1, C, Npad), lambda b: (b, 0, 0)),   # x (per batch)
                pl.BlockSpec((C, kkc), lambda b: (0, 0)),          # w1 (resident)
                pl.BlockSpec((C, 1), lambda b: (0, 0)),            # b1
                pl.BlockSpec((C, kkc), lambda b: (0, 0)),          # w2
                pl.BlockSpec((C, 1), lambda b: (0, 0)),            # b2
                pl.BlockSpec((1, Npad), lambda b: (0, 0)),         # interior mask
            ],
            out_specs=pl.BlockSpec((1, C, Npad), lambda b: (b, 0, 0)),
        ),
        compiler_params=pltpu.CompilerParams(
            dimension_semantics=("parallel",),
            vmem_limit_bytes=32 * 1024 * 1024),
    )(xf, w1m, b1c, w2m, b2c, maskf)

    # Un-pad / un-flatten back to NCHW (wrapper-side glue).
    out = outf[:, :, :HWp].reshape(B, C, Hp, Wp)[:, :, pad:pad + H, pad:pad + W]
    return out


def ref_forward(x, w1, b1, w2, b2):
    """Pure-JAX reference (matches torch semantics, NCHW / OIHW)."""
    dn = ('NCHW', 'OIHW', 'NCHW')
    net = jax.lax.conv_general_dilated(x, w1, (1, 1), 'SAME', dimension_numbers=dn)
    net = net + b1.reshape(1, -1, 1, 1)
    net = jnp.maximum(net, 0.0)
    net = jax.lax.conv_general_dilated(net, w2, (1, 1), 'SAME', dimension_numbers=dn)
    net = net + b2.reshape(1, -1, 1, 1)
    return net + x


if __name__ == "__main__":
    B, C, H, W, K = 2, 4, 16, 16, 3
    key = jax.random.PRNGKey(0)
    k1, k2, k3, k4, k5 = jax.random.split(key, 5)

    # Deterministic parameter init (PyTorch-like uniform bound = 1/sqrt(fan_in)).
    fan_in = C * K * K
    bound = 1.0 / (fan_in ** 0.5)
    x = jax.random.normal(k1, (B, C, H, W), dtype=jnp.float32)
    w1 = jax.random.uniform(k2, (C, C, K, K), jnp.float32, -bound, bound)
    b1 = jax.random.uniform(k3, (C,), jnp.float32, -bound, bound)
    w2 = jax.random.uniform(k4, (C, C, K, K), jnp.float32, -bound, bound)
    b2 = jax.random.uniform(k5, (C,), jnp.float32, -bound, bound)

    fwd = jax.jit(functools.partial(resblock_forward, ksize=K))
    out = jax.block_until_ready(fwd(x, w1, b1, w2, b2))

    ref = jax.block_until_ready(jax.jit(ref_forward)(x, w1, b1, w2, b2))
    assert out.shape == (B, C, H, W)
    if not jnp.allclose(out, ref, atol=1e-4, rtol=1e-4):
        raise AssertionError("Pallas ResBlock mismatch vs reference")

    print("KERNEL_OK")
</pallas_src>

<mosaic_0001>
module attributes {stable_mosaic.version = 11 : i64} {
  func.func @resblock_kernel(%arg0: i32, %arg1: memref<1x4x384xf32, #tpu.memory_space<vmem>>, %arg2: memref<4x36xf32, #tpu.memory_space<vmem>>, %arg3: memref<4x1xf32, #tpu.memory_space<vmem>>, %arg4: memref<4x36xf32, #tpu.memory_space<vmem>>, %arg5: memref<4x1xf32, #tpu.memory_space<vmem>>, %arg6: memref<1x384xf32, #tpu.memory_space<vmem>>, %arg7: memref<1x4x384xf32, #tpu.memory_space<vmem>>) attributes {dimension_semantics = [#tpu.dimension_semantics<parallel>], iteration_bounds = array<i64: 2>, scalar_prefetch = 0 : i64, scratch_operands = 0 : i64, tpu.core_type = #tpu.core_type<tc>, window_params = [{transform_indices = @transform_0, window_bounds = array<i64: 1, 4, 384>}, {pipeline_mode = #tpu.pipeline_mode<synchronous>, transform_indices = @transform_1, window_bounds = array<i64: 4, 36>}, {pipeline_mode = #tpu.pipeline_mode<synchronous>, transform_indices = @transform_2, window_bounds = array<i64: 4, 1>}, {pipeline_mode = #tpu.pipeline_mode<synchronous>, transform_indices = @transform_3, window_bounds = array<i64: 4, 36>}, {pipeline_mode = #tpu.pipeline_mode<synchronous>, transform_indices = @transform_4, window_bounds = array<i64: 4, 1>}, {pipeline_mode = #tpu.pipeline_mode<synchronous>, transform_indices = @transform_5, window_bounds = array<i64: 1, 384>}, {transform_indices = @transform_6, window_bounds = array<i64: 1, 4, 384>}]} {
    %c0 = arith.constant 0 : index
    %c0_0 = arith.constant 0 : index
    %c0_1 = arith.constant 0 : index
    %0 = vector.load %arg1[%c0, %c0_0, %c0_1] : memref<1x4x384xf32, #tpu.memory_space<vmem>>, vector<1x4x384xf32>
    %1 = vector.shape_cast %0 : vector<1x4x384xf32> to vector<4x384xf32>
    %c0_2 = arith.constant 0 : index
    %c0_3 = arith.constant 0 : index
    %2 = vector.load %arg6[%c0_2, %c0_3] : memref<1x384xf32, #tpu.memory_space<vmem>>, vector<1x384xf32>
    %3 = vector.extract_strided_slice %1 {offsets = [0, 365], sizes = [4, 19], strides = [1, 1]} : vector<4x384xf32> to vector<4x19xf32>
    %4 = vector.extract_strided_slice %1 {offsets = [0, 0], sizes = [4, 365], strides = [1, 1]} : vector<4x384xf32> to vector<4x365xf32>
    %5 = tpu.concatenate %3, %4 in 1 : vector<4x19xf32>, vector<4x365xf32> -> vector<4x384xf32>
    %6 = vector.extract_strided_slice %1 {offsets = [0, 366], sizes = [4, 18], strides = [1, 1]} : vector<4x384xf32> to vector<4x18xf32>
    %7 = vector.extract_strided_slice %1 {offsets = [0, 0], sizes = [4, 366], strides = [1, 1]} : vector<4x384xf32> to vector<4x366xf32>
    %8 = tpu.concatenate %6, %7 in 1 : vector<4x18xf32>, vector<4x366xf32> -> vector<4x384xf32>
    %9 = vector.extract_strided_slice %1 {offsets = [0, 367], sizes = [4, 17], strides = [1, 1]} : vector<4x384xf32> to vector<4x17xf32>
    %10 = vector.extract_strided_slice %1 {offsets = [0, 0], sizes = [4, 367], strides = [1, 1]} : vector<4x384xf32> to vector<4x367xf32>
    %11 = tpu.concatenate %9, %10 in 1 : vector<4x17xf32>, vector<4x367xf32> -> vector<4x384xf32>
    %12 = vector.extract_strided_slice %1 {offsets = [0, 383], sizes = [4, 1], strides = [1, 1]} : vector<4x384xf32> to vector<4x1xf32>
    %13 = vector.extract_strided_slice %1 {offsets = [0, 0], sizes = [4, 383], strides = [1, 1]} : vector<4x384xf32> to vector<4x383xf32>
    %14 = tpu.concatenate %12, %13 in 1 : vector<4x1xf32>, vector<4x383xf32> -> vector<4x384xf32>
    %15 = vector.extract_strided_slice %1 {offsets = [0, 1], sizes = [4, 383], strides = [1, 1]} : vector<4x384xf32> to vector<4x383xf32>
    %16 = vector.extract_strided_slice %1 {offsets = [0, 0], sizes = [4, 1], strides = [1, 1]} : vector<4x384xf32> to vector<4x1xf32>
    %17 = tpu.concatenate %15, %16 in 1 : vector<4x383xf32>, vector<4x1xf32> -> vector<4x384xf32>
    %18 = vector.extract_strided_slice %1 {offsets = [0, 17], sizes = [4, 367], strides = [1, 1]} : vector<4x384xf32> to vector<4x367xf32>
    %19 = vector.extract_strided_slice %1 {offsets = [0, 0], sizes = [4, 17], strides = [1, 1]} : vector<4x384xf32> to vector<4x17xf32>
    %20 = tpu.concatenate %18, %19 in 1 : vector<4x367xf32>, vector<4x17xf32> -> vector<4x384xf32>
    %21 = vector.extract_strided_slice %1 {offsets = [0, 18], sizes = [4, 366], strides = [1, 1]} : vector<4x384xf32> to vector<4x366xf32>
    %22 = vector.extract_strided_slice %1 {offsets = [0, 0], sizes = [4, 18], strides = [1, 1]} : vector<4x384xf32> to vector<4x18xf32>
    %23 = tpu.concatenate %21, %22 in 1 : vector<4x366xf32>, vector<4x18xf32> -> vector<4x384xf32>
    %24 = vector.extract_strided_slice %1 {offsets = [0, 19], sizes = [4, 365], strides = [1, 1]} : vector<4x384xf32> to vector<4x365xf32>
    %25 = vector.extract_strided_slice %1 {offsets = [0, 0], sizes = [4, 19], strides = [1, 1]} : vector<4x384xf32> to vector<4x19xf32>
    %26 = tpu.concatenate %24, %25 in 1 : vector<4x365xf32>, vector<4x19xf32> -> vector<4x384xf32>
    %27 = tpu.concatenate %5, %8, %11, %14, %1, %17, %20, %23, %26 in 0 : vector<4x384xf32>, vector<4x384xf32>, vector<4x384xf32>, vector<4x384xf32>, vector<4x384xf32>, vector<4x384xf32>, vector<4x384xf32>, vector<4x384xf32>, vector<4x384xf32> -> vector<36x384xf32>
    %c0_4 = arith.constant 0 : index
    %c0_5 = arith.constant 0 : index
    %28 = vector.load %arg2[%c0_4, %c0_5] : memref<4x36xf32, #tpu.memory_space<vmem>>, vector<4x36xf32>
    %cst = arith.constant dense<0.000000e+00> : vector<4x384xf32>
    %29 = tpu.matmul %28, %27, %cst {dimension_numbers = #tpu.dot_dimension_numbers<[1], [0], [0], [1], [0, 0, 1, 1], [], []>} : vector<4x36xf32>, vector<36x384xf32>, vector<4x384xf32> -> vector<4x384xf32>
    %c0_6 = arith.constant 0 : index
    %c0_7 = arith.constant 0 : index
    %30 = vector.load %arg3[%c0_6, %c0_7] : memref<4x1xf32, #tpu.memory_space<vmem>>, vector<4x1xf32>
    %31 = vector.broadcast %30 : vector<4x1xf32> to vector<4x384xf32>
    %32 = arith.addf %29, %31 : vector<4x384xf32>
    %cst_8 = arith.constant 0.000000e+00 : f32
    %33 = vector.broadcast %cst_8 : f32 to vector<4x384xf32>
    %34 = arith.maximumf %32, %33 : vector<4x384xf32>
    %35 = vector.broadcast %2 : vector<1x384xf32> to vector<4x384xf32>
    %36 = arith.mulf %34, %35 : vector<4x384xf32>
    %37 = vector.extract_strided_slice %36 {offsets = [0, 365], sizes = [4, 19], strides = [1, 1]} : vector<4x384xf32> to vector<4x19xf32>
    %38 = vector.extract_strided_slice %36 {offsets = [0, 0], sizes = [4, 365], strides = [1, 1]} : vector<4x384xf32> to vector<4x365xf32>
    %39 = tpu.concatenate %37, %38 in 1 : vector<4x19xf32>, vector<4x365xf32> -> vector<4x384xf32>
    %40 = vector.extract_strided_slice %36 {offsets = [0, 366], sizes = [4, 18], strides = [1, 1]} : vector<4x384xf32> to vector<4x18xf32>
    %41 = vector.extract_strided_slice %36 {offsets = [0, 0], sizes = [4, 366], strides = [1, 1]} : vector<4x384xf32> to vector<4x366xf32>
    %42 = tpu.concatenate %40, %41 in 1 : vector<4x18xf32>, vector<4x366xf32> -> vector<4x384xf32>
    %43 = vector.extract_strided_slice %36 {offsets = [0, 367], sizes = [4, 17], strides = [1, 1]} : vector<4x384xf32> to vector<4x17xf32>
    %44 = vector.extract_strided_slice %36 {offsets = [0, 0], sizes = [4, 367], strides = [1, 1]} : vector<4x384xf32> to vector<4x367xf32>
    %45 = tpu.concatenate %43, %44 in 1 : vector<4x17xf32>, vector<4x367xf32> -> vector<4x384xf32>
    %46 = vector.extract_strided_slice %36 {offsets = [0, 383], sizes = [4, 1], strides = [1, 1]} : vector<4x384xf32> to vector<4x1xf32>
    %47 = vector.extract_strided_slice %36 {offsets = [0, 0], sizes = [4, 383], strides = [1, 1]} : vector<4x384xf32> to vector<4x383xf32>
    %48 = tpu.concatenate %46, %47 in 1 : vector<4x1xf32>, vector<4x383xf32> -> vector<4x384xf32>
    %49 = vector.extract_strided_slice %36 {offsets = [0, 1], sizes = [4, 383], strides = [1, 1]} : vector<4x384xf32> to vector<4x383xf32>
    %50 = vector.extract_strided_slice %36 {offsets = [0, 0], sizes = [4, 1], strides = [1, 1]} : vector<4x384xf32> to vector<4x1xf32>
    %51 = tpu.concatenate %49, %50 in 1 : vector<4x383xf32>, vector<4x1xf32> -> vector<4x384xf32>
    %52 = vector.extract_strided_slice %36 {offsets = [0, 17], sizes = [4, 367], strides = [1, 1]} : vector<4x384xf32> to vector<4x367xf32>
    %53 = vector.extract_strided_slice %36 {offsets = [0, 0], sizes = [4, 17], strides = [1, 1]} : vector<4x384xf32> to vector<4x17xf32>
    %54 = tpu.concatenate %52, %53 in 1 : vector<4x367xf32>, vector<4x17xf32> -> vector<4x384xf32>
    %55 = vector.extract_strided_slice %36 {offsets = [0, 18], sizes = [4, 366], strides = [1, 1]} : vector<4x384xf32> to vector<4x366xf32>
    %56 = vector.extract_strided_slice %36 {offsets = [0, 0], sizes = [4, 18], strides = [1, 1]} : vector<4x384xf32> to vector<4x18xf32>
    %57 = tpu.concatenate %55, %56 in 1 : vector<4x366xf32>, vector<4x18xf32> -> vector<4x384xf32>
    %58 = vector.extract_strided_slice %36 {offsets = [0, 19], sizes = [4, 365], strides = [1, 1]} : vector<4x384xf32> to vector<4x365xf32>
    %59 = vector.extract_strided_slice %36 {offsets = [0, 0], sizes = [4, 19], strides = [1, 1]} : vector<4x384xf32> to vector<4x19xf32>
    %60 = tpu.concatenate %58, %59 in 1 : vector<4x365xf32>, vector<4x19xf32> -> vector<4x384xf32>
    %61 = tpu.concatenate %39, %42, %45, %48, %36, %51, %54, %57, %60 in 0 : vector<4x384xf32>, vector<4x384xf32>, vector<4x384xf32>, vector<4x384xf32>, vector<4x384xf32>, vector<4x384xf32>, vector<4x384xf32>, vector<4x384xf32>, vector<4x384xf32> -> vector<36x384xf32>
    %c0_9 = arith.constant 0 : index
    %c0_10 = arith.constant 0 : index
    %62 = vector.load %arg4[%c0_9, %c0_10] : memref<4x36xf32, #tpu.memory_space<vmem>>, vector<4x36xf32>
    %cst_11 = arith.constant dense<0.000000e+00> : vector<4x384xf32>
    %63 = tpu.matmul %62, %61, %cst_11 {dimension_numbers = #tpu.dot_dimension_numbers<[1], [0], [0], [1], [0, 0, 1, 1], [], []>} : vector<4x36xf32>, vector<36x384xf32>, vector<4x384xf32> -> vector<4x384xf32>
    %c0_12 = arith.constant 0 : index
    %c0_13 = arith.constant 0 : index
    %64 = vector.load %arg5[%c0_12, %c0_13] : memref<4x1xf32, #tpu.memory_space<vmem>>, vector<4x1xf32>
    %65 = vector.broadcast %64 : vector<4x1xf32> to vector<4x384xf32>
    %66 = arith.addf %63, %65 : vector<4x384xf32>
    %67 = arith.addf %66, %1 : vector<4x384xf32>
    %c0_14 = arith.constant 0 : index
    %c0_15 = arith.constant 0 : index
    %c0_16 = arith.constant 0 : index
    %68 = vector.load %arg7[%c0_14, %c0_15, %c0_16] : memref<1x4x384xf32, #tpu.memory_space<vmem>>, vector<1x4x384xf32>
    %69 = vector.shape_cast %68 : vector<1x4x384xf32> to vector<4x384xf32>
    %70 = vector.shape_cast %67 : vector<4x384xf32> to vector<1x4x384xf32>
    tpu.vector_store %arg7[%c0_14, %c0_15, %c0_16], %70 {strides = array<i32>} : memref<1x4x384xf32, #tpu.memory_space<vmem>>, vector<1x4x384xf32>,
    return
  }
  func.func @transform_0(%arg0: i32) -> (i32, i32, i32) {
    %c0_i32 = arith.constant 0 : i32
    %c0_i32_0 = arith.constant 0 : i32
    %c0_i32_1 = arith.constant 0 : i32
    return %arg0, %c0_i32, %c0_i32_0 : i32, i32, i32
  }
  func.func @transform_1(%arg0: i32) -> (i32, i32) {
    %c0_i32 = arith.constant 0 : i32
    %c0_i32_0 = arith.constant 0 : i32
    %c0_i32_1 = arith.constant 0 : i32
    return %c0_i32, %c0_i32_0 : i32, i32
  }
  func.func @transform_2(%arg0: i32) -> (i32, i32) {
    %c0_i32 = arith.constant 0 : i32
    %c0_i32_0 = arith.constant 0 : i32
    %c0_i32_1 = arith.constant 0 : i32
    return %c0_i32, %c0_i32_0 : i32, i32
  }
  func.func @transform_3(%arg0: i32) -> (i32, i32) {
    %c0_i32 = arith.constant 0 : i32
    %c0_i32_0 = arith.constant 0 : i32
    %c0_i32_1 = arith.constant 0 : i32
    return %c0_i32, %c0_i32_0 : i32, i32
  }
  func.func @transform_4(%arg0: i32) -> (i32, i32) {
    %c0_i32 = arith.constant 0 : i32
    %c0_i32_0 = arith.constant 0 : i32
    %c0_i32_1 = arith.constant 0 : i32
    return %c0_i32, %c0_i32_0 : i32, i32
  }
  func.func @transform_5(%arg0: i32) -> (i32, i32) {
    %c0_i32 = arith.constant 0 : i32
    %c0_i32_0 = arith.constant 0 : i32
    %c0_i32_1 = arith.constant 0 : i32
    return %c0_i32, %c0_i32_0 : i32, i32
  }
  func.func @transform_6(%arg0: i32) -> (i32, i32, i32) {
    %c0_i32 = arith.constant 0 : i32
    %c0_i32_0 = arith.constant 0 : i32
    %c0_i32_1 = arith.constant 0 : i32
    return %arg0, %c0_i32, %c0_i32_0 : i32, i32, i32
  }
}

</mosaic_0001>

<llo_original>
// kernel: resblock_forward.1
$region0: #{resblock_forward.1}
  #allocation0 [shape = 'u32[]', space=smem, size = 0x4, offset = 0x4, fixed_abs, tag = 'smem constant byte address 0x4 - core index']
  #allocation1 [shape = 'u32[144,128]{1,0:T(1,128)}', space=vmem, size = 0x12000, scoped, tag = 'internal scratch']
  %s0 = inlined_call_operand.vmem [shape: f32[2,4,384], index: 0, kind: input, shape index: {}]
  %s1 = inlined_call_operand.vmem [shape: f32[4,36], index: 1, kind: input, shape index: {}]
  %s2 = inlined_call_operand.vmem [shape: f32[4,1], index: 2, kind: input, shape index: {}]
  %s3 = inlined_call_operand.vmem [shape: f32[4,36], index: 3, kind: input, shape index: {}]
  %s4 = inlined_call_operand.vmem [shape: f32[4,1], index: 4, kind: input, shape index: {}]
  %s5 = inlined_call_operand.vmem [shape: f32[1,384], index: 5, kind: input, shape index: {}]
  %s6 = inlined_call_operand.vmem [shape: f32[2,4,384], index: 6, kind: output, shape index: {}]
  %s7 = sld [smem:[#allocation0]]
  $region57: #{resblock_forward.1} parent=0
    _
  %s9 = ssub.s32 1, %s7
  %s10 = scalar_select 0, %s9, %s7
  loop: start=0, step=1, limit=4
  $region2: #{resblock_forward.1} parent=0 // loop_pre_header
    _
  $region3: #{resblock_forward.1} parent=0 // loop_header
    %s12 = sphi 0, %s16
    %p13 = scmp.ge.s32.totalorder %s12, 4
    %s22 = sphi 0, %s24
    %s25 = sphi 0, %s22
    %s26 = sphi 0, %s25
    %s42 = sphi 0, %s26
    %s46 = sphi 0, %s46
    %s48 = sphi 0, %s46
    %s49 = sphi 0, %s48
    %s63 = sphi 0, %s49
    %s67 = sphi 0, %s67
    %s69 = sphi 0, %s67
    %s70 = sphi 0, %s69
    %s84 = sphi 0, %s70
    %s88 = sphi 0, %s88
    %s90 = sphi 0, %s88
    %s91 = sphi 0, %s90
    %s105 = sphi 0, %s91
    %s109 = sphi 0, %s109
    %s111 = sphi 0, %s109
    %s112 = sphi 0, %s111
    %s126 = sphi 0, %s112
    %s130 = sphi 0, %s130
    %s132 = sphi 0, %s130
    %s133 = sphi 0, %s132
    %s147 = sphi 0, %s133
    %s153 = sphi 0, %s155
    %s156 = sphi 0, %s153
    %s157 = sphi 0, %s156
    %s173 = sphi 0, %s157
  $region4: #{resblock_forward.1} parent=0 // loop_header_branch
    %15 = sbr.rel (%p13) target = $region8
  $region5: #{resblock_forward.1} parent=0 // loop_body
    %s17 = ssub.s32 %s12, 1
    %s18 = ssub.s32 %s12, 2
    %s19 = sadd.s32 %s12, 1
    %s20 = ssub.s32 %s12, %s19
    %p21 = scmp.eq.s32.totalorder %s20, 0
    %s23 = sadd.s32 %s22, 1
    %s24 = scalar_select %p21, %s22, %s23
    %p27 = pneg %p21
    %p28 = scmp.eq.s32.totalorder %s12, 1
    %p29 = por %p27, %p28
    %p30 = scmp.ne.s32.totalorder %s22, %s25
    %p31 = scmp.eq.s32.totalorder %s12, 0
    %p32 = por %p30, %p31
    %p33 = scmp.ne.s32.totalorder %s22, %s25
    %p34 = scmp.eq.s32.totalorder %s17, 1
    %p35 = por %p33, %p34
    %p36 = scmp.ne.s32.totalorder %s25, %s26
    %p37 = scmp.eq.s32.totalorder %s17, 0
    %p38 = por %p36, %p37
    %p39 = scmp.ne.s32.totalorder %s25, %s26
    %p40 = scmp.eq.s32.totalorder %s18, 1
    %p41 = por %p39, %p40
    %p43 = scmp.ne.s32.totalorder %s26, %s42
    %p44 = scmp.eq.s32.totalorder %s18, 0
    %p45 = por %p43, %p44
    %s47 = sadd.s32 %s46, 1
    %p50 = scmp.eq.s32.totalorder %s12, 1
    %p51 = scmp.ne.s32.totalorder %s46, %s48
    %p52 = scmp.eq.s32.totalorder %s12, 0
    %p53 = por %p51, %p52
    %p54 = scmp.ne.s32.totalorder %s46, %s48
    %p55 = scmp.eq.s32.totalorder %s17, 1
    %p56 = por %p54, %p55
    %p57 = scmp.ne.s32.totalorder %s48, %s49
    %p58 = scmp.eq.s32.totalorder %s17, 0
    %p59 = por %p57, %p58
    %p60 = scmp.ne.s32.totalorder %s48, %s49
    %p61 = scmp.eq.s32.totalorder %s18, 1
    %p62 = por %p60, %p61
    %p64 = scmp.ne.s32.totalorder %s49, %s63
    %p65 = scmp.eq.s32.totalorder %s18, 0
    %p66 = por %p64, %p65
    %s68 = sadd.s32 %s67, 1
    %p71 = scmp.eq.s32.totalorder %s12, 1
    %p72 = scmp.ne.s32.totalorder %s67, %s69
    %p73 = scmp.eq.s32.totalorder %s12, 0
    %p74 = por %p72, %p73
    %p75 = scmp.ne.s32.totalorder %s67, %s69
    %p76 = scmp.eq.s32.totalorder %s17, 1
    %p77 = por %p75, %p76
    %p78 = scmp.ne.s32.totalorder %s69, %s70
    %p79 = scmp.eq.s32.totalorder %s17, 0
    %p80 = por %p78, %p79
    %p81 = scmp.ne.s32.totalorder %s69, %s70
    %p82 = scmp.eq.s32.totalorder %s18, 1
    %p83 = por %p81, %p82
    %p85 = scmp.ne.s32.totalorder %s70, %s84
    %p86 = scmp.eq.s32.totalorder %s18, 0
    %p87 = por %p85, %p86
    %s89 = sadd.s32 %s88, 1
    %p92 = scmp.eq.s32.totalorder %s12, 1
    %p93 = scmp.ne.s32.totalorder %s88, %s90
    %p94 = scmp.eq.s32.totalorder %s12, 0
    %p95 = por %p93, %p94
    %p96 = scmp.ne.s32.totalorder %s88, %s90
    %p97 = scmp.eq.s32.totalorder %s17, 1
    %p98 = por %p96, %p97
    %p99 = scmp.ne.s32.totalorder %s90, %s91
    %p100 = scmp.eq.s32.totalorder %s17, 0
    %p101 = por %p99, %p100
    %p102 = scmp.ne.s32.totalorder %s90, %s91
    %p103 = scmp.eq.s32.totalorder %s18, 1
    %p104 = por %p102, %p103
    %p106 = scmp.ne.s32.totalorder %s91, %s105
    %p107 = scmp.eq.s32.totalorder %s18, 0
    %p108 = por %p106, %p107
    %s110 = sadd.s32 %s109, 1
    %p113 = scmp.eq.s32.totalorder %s12, 1
    %p114 = scmp.ne.s32.totalorder %s109, %s111
    %p115 = scmp.eq.s32.totalorder %s12, 0
    %p116 = por %p114, %p115
    %p117 = scmp.ne.s32.totalorder %s109, %s111
    %p118 = scmp.eq.s32.totalorder %s17, 1
    %p119 = por %p117, %p118
    %p120 = scmp.ne.s32.totalorder %s111, %s112
    %p121 = scmp.eq.s32.totalorder %s17, 0
    %p122 = por %p120, %p121
    %p123 = scmp.ne.s32.totalorder %s111, %s112
    %p124 = scmp.eq.s32.totalorder %s18, 1
    %p125 = por %p123, %p124
    %p127 = scmp.ne.s32.totalorder %s112, %s126
    %p128 = scmp.eq.s32.totalorder %s18, 0
    %p129 = por %p127, %p128
    %s131 = sadd.s32 %s130, 1
    %p134 = scmp.eq.s32.totalorder %s12, 1
    %p135 = scmp.ne.s32.totalorder %s130, %s132
    %p136 = scmp.eq.s32.totalorder %s12, 0
    %p137 = por %p135, %p136
    %p138 = scmp.ne.s32.totalorder %s130, %s132
    %p139 = scmp.eq.s32.totalorder %s17, 1
    %p140 = por %p138, %p139
    %p141 = scmp.ne.s32.totalorder %s132, %s133
    %p142 = scmp.eq.s32.totalorder %s17, 0
    %p143 = por %p141, %p142
    %p144 = scmp.ne.s32.totalorder %s132, %s133
    %p145 = scmp.eq.s32.totalorder %s18, 1
    %p146 = por %p144, %p145
    %p148 = scmp.ne.s32.totalorder %s133, %s147
    %p149 = scmp.eq.s32.totalorder %s18, 0
    %p150 = por %p148, %p149
    %s151 = ssub.s32 %s12, %s19
    %p152 = scmp.eq.s32.totalorder %s151, 0
    %s154 = sadd.s32 %s153, 1
    %s155 = scalar_select %p152, %s153, %s154
    %p158 = pneg %p152
    %p159 = scmp.eq.s32.totalorder %s12, 1
    %p160 = por %p158, %p159
    %p161 = scmp.ne.s32.totalorder %s153, %s156
    %p162 = scmp.eq.s32.totalorder %s12, 0
    %p163 = por %p161, %p162
    %p164 = scmp.ne.s32.totalorder %s153, %s156
    %p165 = scmp.eq.s32.totalorder %s17, 1
    %p166 = por %p164, %p165
    %p167 = scmp.ne.s32.totalorder %s156, %s157
    %p168 = scmp.eq.s32.totalorder %s17, 0
    %p169 = por %p167, %p168
    %p170 = scmp.ne.s32.totalorder %s156, %s157
    %p171 = scmp.eq.s32.totalorder %s18, 1
    %p172 = por %p170, %p171
    %p174 = scmp.ne.s32.totalorder %s157, %s173
    %p175 = scmp.eq.s32.totalorder %s18, 0
    %p176 = por %p174, %p175
    %p177 = scmp.le.s32.totalorder 1, %s12
    %p178 = scmp.lt.s32.totalorder %s12, 3
    %p179 = pnand %p177, %p178
    %p180 = pneg %p179
    // Predicated region
    $region9: #{resblock_forward.1} parent=5 // pred_check
      _
    $region10: #{resblock_forward.1} parent=5 // pred_check_branch
      %182 = sbr.rel (%p179) target = $region12
    $region11: #{resblock_forward.1} parent=5 // pred_region
      %s183 = ssub.s32 %s12, 1
      // Predicated region
      $region13: #{resblock_forward.1} parent=11 // pred_check
        %p184 = pneg %p59
      $region14: #{resblock_forward.1} parent=11 // pred_check_branch
        %186 = sbr.rel (%p184) target = $region16
      $region15: #{resblock_forward.1} parent=11 // pred_region
        _
      $region16: #{resblock_forward.1} parent=11 // pred_fallthru
        _
      // Predicated region
      $region17: #{resblock_forward.1} parent=11 // pred_check
        %p187 = pneg %p80
      $region18: #{resblock_forward.1} parent=11 // pred_check_branch
        %189 = sbr.rel (%p187) target = $region20
      $region19: #{resblock_forward.1} parent=11 // pred_region
        _
      $region20: #{resblock_forward.1} parent=11 // pred_fallthru
        _
      // Predicated region
      $region21: #{resblock_forward.1} parent=11 // pred_check
        %p190 = pneg %p101
      $region22: #{resblock_forward.1} parent=11 // pred_check_branch
        %192 = sbr.rel (%p190) target = $region24
      $region23: #{resblock_forward.1} parent=11 // pred_region
        _
      $region24: #{resblock_forward.1} parent=11 // pred_fallthru
        _
      // Predicated region
      $region25: #{resblock_forward.1} parent=11 // pred_check
        %p193 = pneg %p122
      $region26: #{resblock_forward.1} parent=11 // pred_check_branch
        %195 = sbr.rel (%p193) target = $region28
      $region27: #{resblock_forward.1} parent=11 // pred_region
        _
      $region28: #{resblock_forward.1} parent=11 // pred_fallthru
        _
      // Predicated region
      $region29: #{resblock_forward.1} parent=11 // pred_check
        %p196 = pneg %p143
      $region30: #{resblock_forward.1} parent=11 // pred_check_branch
        %198 = sbr.rel (%p196) target = $region32
      $region31: #{resblock_forward.1} parent=11 // pred_region
        _
      $region32: #{resblock_forward.1} parent=11 // pred_fallthru
        _
    $region12: #{resblock_forward.1} parent=5 // pred_fallthru
      _
    %p199 = scmp.lt.s32.totalorder %s12, 2
    // Predicated region
    $region33: #{resblock_forward.1} parent=5 // pred_check
      %p200 = pneg %p199
    $region34: #{resblock_forward.1} parent=5 // pred_check_branch
      %202 = sbr.rel (%p200) target = $region36
    $region35: #{resblock_forward.1} parent=5 // pred_region
      // Predicated region
      $region37: #{resblock_forward.1} parent=35 // pred_check
        %p203 = pneg %p32
      $region38: #{resblock_forward.1} parent=35 // pred_check_branch
        %205 = sbr.rel (%p203) target = $region40
      $region39: #{resblock_forward.1} parent=35 // pred_region
        %p206 = scmp.lt.s32.totalorder %s12, 1
        %s207 = scalar_select %p206, %s12, 1
        %s208 = smul.addr %s207, 3
        %s209 = smul.addr %s208, 4
        %s210 = scalar_lea.vmem %s0, %s209
      $region40: #{resblock_forward.1} parent=35 // pred_fallthru
        _
    $region36: #{resblock_forward.1} parent=5 // pred_fallthru
      _
    %p211 = scmp.le.s32.totalorder 1, %s12
    %p212 = scmp.lt.s32.totalorder %s12, 3
    %p213 = pnand %p211, %p212
    %p214 = pneg %p213
    // Predicated region
    $region41: #{resblock_forward.1} parent=5 // pred_check
      _
    $region42: #{resblock_forward.1} parent=5 // pred_check_branch
      %216 = sbr.rel (%p213) target = $region44
    $region43: #{resblock_forward.1} parent=5 // pred_region
      %s217 = ssub.s32 %s12, 1
      %p218 = scmp.lt.s32.totalorder %s17, 1
      %s219 = scalar_select %p218, %s17, 1
      %s220 = smul.addr %s219, 3
      %s221 = smul.addr %s220, 4
      %s222 = scalar_lea.vmem %s0, %s221
      %p223 = pneg %p38
      %p224 = pneg %p35
      %p225 = pneg %p59
      %p226 = pneg %p56
      %p227 = pneg %p80
      %p228 = pneg %p77
      %p229 = pneg %p101
      %p230 = pneg %p98
      %p231 = pneg %p122
      %p232 = pneg %p119
      %p233 = pneg %p143
      %p234 = pneg %p140
      %p235 = pneg %p169
      %p236 = pneg %p166
      %p237 = scmp.lt.s32.totalorder %s17, 1
      %s238 = scalar_select %p237, %s17, 1
      %s239 = smul.addr %s238, 3
      %s240 = smul.addr %s239, 4
      %s241 = scalar_lea.vmem %s6, %s240
      %p242 = scmp.lt.s32.totalorder %s17, 1
      %s243 = scalar_select %p242, %s17, 1
      %s244 = smul.addr %s243, 3
      %s245 = smul.addr %s244, 4
      %s246 = scalar_lea.vmem %s0, %s245
      %p247 = scmp.lt.s32.totalorder %s17, 1
      %s248 = scalar_select %p247, %s17, 1
      %s249 = smul.addr %s248, 3
      %s250 = smul.addr %s249, 4
      %s251 = scalar_lea.vmem %s6, %s250
      %v252 = vld [vmem:[%s246] sm:$0xff]
      %v253 = vld [vmem:[%s246 + $0x8] sm:$0xf]
      %v254 = vld [vmem:[%s5] sm:$0x7]
      %256 = vrot.lane.b32.xlu0 %v253, 19
      %v257 = vpop.permute.xlu0 %256
      %v260 = vcombine.high %v252, %v252
      %261 = vrot.lane.b32.xlu0 %v252, 19
      %v262 = vpop.permute.xlu0 %261
      %263 = vrot.lane.b32.xlu0 %v260, 19
      %v264 = vpop.permute.xlu0 %263
      %vm265 = vcmask 154624
      %v266 = vsel %vm265, %v262, %v264
      %v267 = vsel %vm265, %v264, %v257
      %v271 = vsel %vm265, %v257, %v262
      %272 = vrot.lane.b32.xlu0 %v253, 18
      %v273 = vpop.permute.xlu0 %272
      %275 = vrot.lane.b32.xlu0 %v252, 18
      %v276 = vpop.permute.xlu0 %275
      %277 = vrot.lane.b32.xlu0 %v260, 18
      %v278 = vpop.permute.xlu0 %277
      %vm279 = vcmask 146432
      %v280 = vsel %vm279, %v276, %v278
      %v281 = vsel %vm279, %v278, %v273
      %v283 = vsel %vm279, %v273, %v276
      %284 = vrot.lane.b32.xlu0 %v253, 17
      %v285 = vpop.permute.xlu0 %284
      %287 = vrot.lane.b32.xlu0 %v252, 17
      %v288 = vpop.permute.xlu0 %287
      %289 = vrot.lane.b32.xlu0 %v260, 17
      %v290 = vpop.permute.xlu0 %289
      %vm291 = vcmask 138240
      %v292 = vsel %vm291, %v288, %v290
      %v293 = vsel %vm291, %v290, %v285
      %v297 = vsel %vm291, %v285, %v288
      %298 = vrot.lane.b32.xlu0 %v253, 1
      %v299 = vpop.permute.xlu0 %298
      %301 = vrot.lane.b32.xlu0 %v252, 1
      %v302 = vpop.permute.xlu0 %301
      %303 = vrot.lane.b32.xlu0 %v260, 1
      %v304 = vpop.permute.xlu0 %303
      %vm305 = vcmask 7168
      %v306 = vsel %vm305, %v302, %v304
      %v307 = vsel %vm305, %v304, %v299
      %v309 = vsel %vm305, %v299, %v302
      %310 = vrot.lane.b32.xlu0 %v252, 127
      %v311 = vpop.permute.xlu0 %310
      %312 = vrot.lane.b32.xlu0 %v260, 127
      %v313 = vpop.permute.xlu0 %312
      %314 = vrot.lane.b32.xlu0 %v253, 127
      %v315 = vpop.permute.xlu0 %314
      %vm316 = vcmask 1039360
      %v317 = vsel %vm316, %v311, %v313
      %v318 = vsel %vm316, %v313, %v315
      %v321 = vsel %vm316, %v315, %v311
      %322 = vrot.lane.b32.xlu0 %v252, 111
      %v323 = vpop.permute.xlu0 %322
      %324 = vrot.lane.b32.xlu0 %v260, 111
      %v325 = vpop.permute.xlu0 %324
      %326 = vrot.lane.b32.xlu0 %v253, 111
      %v327 = vpop.permute.xlu0 %326
      %vm328 = vcmask 908288
      %v329 = vsel %vm328, %v323, %v325
      %v330 = vsel %vm328, %v325, %v327
      %v335 = vsel %vm328, %v327, %v323
      %336 = vrot.lane.b32.xlu0 %v252, 110
      %v337 = vpop.permute.xlu0 %336
      %338 = vrot.lane.b32.xlu0 %v260, 110
      %v339 = vpop.permute.xlu0 %338
      %340 = vrot.lane.b32.xlu0 %v253, 110
      %v341 = vpop.permute.xlu0 %340
      %vm342 = vcmask 900096
      %v343 = vsel %vm342, %v337, %v339
      %v344 = vsel %vm342, %v339, %v341
      %v347 = vsel %vm342, %v341, %v337
      %348 = vrot.lane.b32.xlu0 %v252, 109
      %v349 = vpop.permute.xlu0 %348
      %350 = vrot.lane.b32.xlu0 %v260, 109
      %v351 = vpop.permute.xlu0 %350
      %352 = vrot.lane.b32.xlu0 %v253, 109
      %v353 = vpop.permute.xlu0 %352
      %vm354 = vcmask 891904
      %v355 = vsel %vm354, %v349, %v351
      %v356 = vsel %vm354, %v351, %v353
      %v359 = vsel %vm354, %v353, %v349
      %v361 = vrot.slane %v283, 4
      %v362 = vrot.slane %v280, 4
      %v363 = vrot.slane %v281, 4
      %v368 = vrot.slane %v309, 4
      %v369 = vrot.slane %v306, 4
      %v370 = vrot.slane %v307, 4
      %v376 = vrot.slane %v317, 4
      %v377 = vrot.slane %v318, 4
      %v378 = vrot.slane %v321, 4
      %v383 = vrot.slane %v343, 4
      %v384 = vrot.slane %v344, 4
      %v385 = vrot.slane %v347, 4
      %vm389 = vcmask 1043456
      %v390 = vsel %vm389, %v271, %v361
      %v391 = vsel %vm389, %v266, %v362
      %v392 = vsel %vm389, %v267, %v363
      %v393 = vsel %vm389, %v297, %v368
      %v394 = vsel %vm389, %v292, %v369
      %v395 = vsel %vm389, %v293, %v370
      %v396 = vsel %vm389, %v252, %v376
      %v397 = vsel %vm389, %v260, %v377
      %v398 = vsel %vm389, %v253, %v378
      %v399 = vsel %vm389, %v329, %v383
      %v400 = vsel %vm389, %v330, %v384
      %v401 = vsel %vm389, %v335, %v385
      %v402 = vld [vmem:[%s1] sm:$0xf]
      %v403 = vld [vmem:[%s2] sm:$0xf]
      %405 = vset.pattern.permute.xlu0 0
      %406 = vperm.xlu0 %405, %v403
      %v407 = vpop.permute.xlu0 %406
      %vm409 = vcmask 293888
      %v411 = vsel %vm409, %v402, 0
      %v413 = vsel %vm389, %v355, 0
      %v415 = vsel %vm389, %v356, 0
      %v418 = vsel %vm389, %v359, 0
      %420 = vmatprep.subr.mxu0 0.0
      %421 = vmatpush1.msra.mxu0 0.0
      %422 = vmatprep.subr.mxu0 0.0
      %423 = vmatpush1.msra.mxu0 0.0
      %424 = vmatprep.subr.mxu0 0.0
      %425 = vmatpush1.msra.mxu0 0.0
      %426 = vmatprep.subr.mxu0 0.0
      %427 = vmatpush1.msra.mxu0 0.0
      %428 = vmatprep.subr.mxu0 0.0
      %429 = vmatpush1.msra.mxu0 0.0
      %430 = vmatprep.subr.mxu0 0.0
      %431 = vmatpush1.msra.mxu0 0.0
      %432 = vmatprep.subr.mxu0 0.0
      %433 = vmatpush1.msra.mxu0 0.0
      %434 = vmatprep.subr.mxu0 0.0
      %435 = vmatpush1.msra.mxu0 0.0
      %436 = vmatprep.subr.mxu0 0.0
      %437 = vmatpush1.msra.mxu0 0.0
      %438 = vmatprep.subr.mxu0 0.0
      %439 = vmatpush1.msra.mxu0 0.0
      %440 = vmatprep.subr.mxu0 0.0
      %441 = vmatpush1.msra.mxu0 0.0
      %442 = vmatprep.subr.mxu0 %v415
      %443 = vmatpush1.msra.mxu0 %v413
      %444 = vmatprep.subr.mxu0 %v400
      %445 = vmatpush1.msra.mxu0 %v399
      %446 = vmatprep.subr.mxu0 %v397
      %447 = vmatpush1.msra.mxu0 %v396
      %448 = vmatprep.subr.mxu0 %v394
      %449 = vmatpush1.msra.mxu0 %v393
      %450 = vmatprep.subr.mxu0 %v391
      %451 = vmatpush1.msra.mxu0 %v390
      %452 = vmatprep.subr.mxu0 0.0
      %453 = vmatpush2.msra.mxu0 0.0
      %454 = vmatprep.subr.mxu0 0.0
      %455 = vmatpush2.msra.mxu0 0.0
      %456 = vmatprep.subr.mxu0 0.0
      %457 = vmatpush2.msra.mxu0 0.0
      %458 = vmatprep.subr.mxu0 0.0
      %459 = vmatpush2.msra.mxu0 0.0
      %460 = vmatprep.subr.mxu0 0.0
      %461 = vmatpush2.msra.mxu0 0.0
      %462 = vmatprep.subr.mxu0 0.0
      %463 = vmatpush2.msra.mxu0 0.0
      %464 = vmatprep.subr.mxu0 0.0
      %465 = vmatpush2.msra.mxu0 0.0
      %466 = vmatprep.subr.mxu0 0.0
      %467 = vmatpush2.msra.mxu0 0.0
      %468 = vmatprep.subr.mxu0 0.0
      %469 = vmatpush2.msra.mxu0 0.0
      %470 = vmatprep.subr.mxu0 0.0
      %471 = vmatpush2.msra.mxu0 0.0
      %472 = vmatprep.subr.mxu0 0.0
      %473 = vmatpush2.msra.mxu0 0.0
      %474 = vmatprep.subr.mxu0 0.0
      %475 = vmatpush2.msra.mxu0 0.0
      %476 = vmatprep.subr.mxu0 0.0
      %477 = vmatpush2.msra.mxu0 0.0
      %478 = vmatprep.subr.mxu0 0.0
      %479 = vmatpush2.msra.mxu0 0.0
      %480 = vmatprep.subr.mxu0 0.0
      %481 = vmatpush2.msra.mxu0 0.0
      %482 = vmatprep.subr.mxu0 0.0
      %483 = vmatpush2.msra.mxu0 0.0
      %484 = vmatprep.mubr.f32.mxu0 0.0
      %485 = vmatmul.mubr.f32.gmra.mxu0 %v411
      %v486 = vpop.f32.mrf.mxu0
      %v487 = vadd.f32 %v407, %v486
      %v488 = vpop.f32.mrf.mxu0
      %v489 = vadd.f32 %v407, %v488
      %490 = vdwg.mxu0
      %491 = vmatprep.subr.mxu0 0.0
      %492 = vmatpush1.msra.mxu0 0.0
      %493 = vmatprep.subr.mxu0 0.0
      %494 = vmatpush1.msra.mxu0 0.0
      %495 = vmatprep.subr.mxu0 0.0
      %496 = vmatpush1.msra.mxu0 0.0
      %497 = vmatprep.subr.mxu0 0.0
      %498 = vmatpush1.msra.mxu0 0.0
      %499 = vmatprep.subr.mxu0 0.0
      %500 = vmatpush1.msra.mxu0 0.0
      %501 = vmatprep.subr.mxu0 0.0
      %502 = vmatpush1.msra.mxu0 0.0
      %503 = vmatprep.subr.mxu0 0.0
      %504 = vmatpush1.msra.mxu0 0.0
      %505 = vmatprep.subr.mxu0 0.0
      %506 = vmatpush1.msra.mxu0 0.0
      %507 = vmatprep.subr.mxu0 0.0
      %508 = vmatpush1.msra.mxu0 0.0
      %509 = vmatprep.subr.mxu0 0.0
      %510 = vmatpush1.msra.mxu0 0.0
      %511 = vmatprep.subr.mxu0 0.0
      %512 = vmatpush1.msra.mxu0 0.0
      %513 = vmatprep.subr.mxu0 0.0
      %514 = vmatpush1.msra.mxu0 %v418
      %515 = vmatprep.subr.mxu0 0.0
      %516 = vmatpush1.msra.mxu0 %v401
      %517 = vmatprep.subr.mxu0 0.0
      %518 = vmatpush1.msra.mxu0 %v398
      %519 = vmatprep.subr.mxu0 0.0
      %520 = vmatpush1.msra.mxu0 %v395
      %521 = vmatprep.subr.mxu0 0.0
      %522 = vmatpush1.msra.mxu0 %v392
      %523 = vmatprep.subr.mxu0 0.0
      %524 = vmatpush2.msra.mxu0 0.0
      %525 = vmatprep.subr.mxu0 0.0
      %526 = vmatpush2.msra.mxu0 0.0
      %527 = vmatprep.subr.mxu0 0.0
      %528 = vmatpush2.msra.mxu0 0.0
      %529 = vmatprep.subr.mxu0 0.0
      %530 = vmatpush2.msra.mxu0 0.0
      %531 = vmatprep.subr.mxu0 0.0
      %532 = vmatpush2.msra.mxu0 0.0
      %533 = vmatprep.subr.mxu0 0.0
      %534 = vmatpush2.msra.mxu0 0.0
      %535 = vmatprep.subr.mxu0 0.0
      %536 = vmatpush2.msra.mxu0 0.0
      %537 = vmatprep.subr.mxu0 0.0
      %538 = vmatpush2.msra.mxu0 0.0
      %539 = vmatprep.subr.mxu0 0.0
      %540 = vmatpush2.msra.mxu0 0.0
      %541 = vmatprep.subr.mxu0 0.0
      %542 = vmatpush2.msra.mxu0 0.0
      %543 = vmatprep.subr.mxu0 0.0
      %544 = vmatpush2.msra.mxu0 0.0
      %545 = vmatprep.subr.mxu0 0.0
      %546 = vmatpush2.msra.mxu0 0.0
      %547 = vmatprep.subr.mxu0 0.0
      %548 = vmatpush2.msra.mxu0 0.0
      %549 = vmatprep.subr.mxu0 0.0
      %550 = vmatpush2.msra.mxu0 0.0
      %551 = vmatprep.subr.mxu0 0.0
      %552 = vmatpush2.msra.mxu0 0.0
      %553 = vmatprep.subr.mxu0 0.0
      %554 = vmatpush2.msra.mxu0 0.0
      %555 = vmatprep.mubr.f32.mxu0 0.0
      %556 = vmatmul.mubr.f32.gmra.mxu0 %v411
      %v557 = vpop.f32.mrf.mxu0
      %v558 = vadd.f32 %v407, %v557
      %v559 = vpop.f32.mrf.mxu0
      %560 = vdwg.mxu0
      %v561 = vmax.f32 %v487, 0.0
      %v562 = vmax.f32 %v489, 0.0
      %v563 = vmax.f32 %v558, 0.0
      %v565 = vlaneseq
      %v566 = vshrl.u32 %v565, 7
      %v567 = vsub.s32 0, %v566
      %v568 = vrot.slane %v254, %v567
      %v569 = vlaneseq
      %v570 = vshrl.u32 %v569, 7
      %v571 = vsub.s32 1, %v570
      %v572 = vrot.slane %v254, %v571
      %v573 = vlaneseq
      %v574 = vshrl.u32 %v573, 7
      %v575 = vsub.s32 2, %v574
      %v576 = vrot.slane %v254, %v575
      %v580 = vmul.f32 %v561, %v568
      %v581 = vmul.f32 %v562, %v572
      %v582 = vmul.f32 %v563, %v576
      %584 = vrot.lane.b32.xlu0 %v582, 19
      %v585 = vpop.permute.xlu0 %584
      %589 = vrot.lane.b32.xlu0 %v580, 19
      %v590 = vpop.permute.xlu0 %589
      %591 = vrot.lane.b32.xlu0 %v581, 19
      %v592 = vpop.permute.xlu0 %591
      %v593 = vsel %vm265, %v590, %v592
      %v594 = vsel %vm265, %v592, %v585
      %v598 = vsel %vm265, %v585, %v590
      %599 = vrot.lane.b32.xlu0 %v582, 18
      %v600 = vpop.permute.xlu0 %599
      %602 = vrot.lane.b32.xlu0 %v580, 18
      %v603 = vpop.permute.xlu0 %602
      %604 = vrot.lane.b32.xlu0 %v581, 18
      %v605 = vpop.permute.xlu0 %604
      %v606 = vsel %vm279, %v603, %v605
      %v607 = vsel %vm279, %v605, %v600
      %v609 = vsel %vm279, %v600, %v603
      %610 = vrot.lane.b32.xlu0 %v582, 17
      %v611 = vpop.permute.xlu0 %610
      %613 = vrot.lane.b32.xlu0 %v580, 17
      %v614 = vpop.permute.xlu0 %613
      %615 = vrot.lane.b32.xlu0 %v581, 17
      %v616 = vpop.permute.xlu0 %615
      %v617 = vsel %vm291, %v614, %v616
      %v618 = vsel %vm291, %v616, %v611
      %v622 = vsel %vm291, %v611, %v614
      %623 = vrot.lane.b32.xlu0 %v582, 1
      %v624 = vpop.permute.xlu0 %623
      %626 = vrot.lane.b32.xlu0 %v580, 1
      %v627 = vpop.permute.xlu0 %626
      %628 = vrot.lane.b32.xlu0 %v581, 1
      %v629 = vpop.permute.xlu0 %628
      %v630 = vsel %vm305, %v627, %v629
      %v631 = vsel %vm305, %v629, %v624
      %v633 = vsel %vm305, %v624, %v627
      %634 = vrot.lane.b32.xlu0 %v580, 127
      %v635 = vpop.permute.xlu0 %634
      %636 = vrot.lane.b32.xlu0 %v581, 127
      %v637 = vpop.permute.xlu0 %636
      %638 = vrot.lane.b32.xlu0 %v582, 127
      %v639 = vpop.permute.xlu0 %638
      %v640 = vsel %vm316, %v635, %v637
      %v641 = vsel %vm316, %v637, %v639
      %v644 = vsel %vm316, %v639, %v635
      %645 = vrot.lane.b32.xlu0 %v580, 111
      %v646 = vpop.permute.xlu0 %645
      %647 = vrot.lane.b32.xlu0 %v581, 111
      %v648 = vpop.permute.xlu0 %647
      %649 = vrot.lane.b32.xlu0 %v582, 111
      %v650 = vpop.permute.xlu0 %649
      %v651 = vsel %vm328, %v646, %v648
      %v652 = vsel %vm328, %v648, %v650
      %v657 = vsel %vm328, %v650, %v646
      %658 = vrot.lane.b32.xlu0 %v580, 110
      %v659 = vpop.permute.xlu0 %658
      %660 = vrot.lane.b32.xlu0 %v581, 110
      %v661 = vpop.permute.xlu0 %660
      %662 = vrot.lane.b32.xlu0 %v582, 110
      %v663 = vpop.permute.xlu0 %662
      %v664 = vsel %vm342, %v659, %v661
      %v665 = vsel %vm342, %v661, %v663
      %v668 = vsel %vm342, %v663, %v659
      %669 = vrot.lane.b32.xlu0 %v580, 109
      %v670 = vpop.permute.xlu0 %669
      %671 = vrot.lane.b32.xlu0 %v581, 109
      %v672 = vpop.permute.xlu0 %671
      %673 = vrot.lane.b32.xlu0 %v582, 109
      %v674 = vpop.permute.xlu0 %673
      %v675 = vsel %vm354, %v670, %v672
      %v676 = vsel %vm354, %v672, %v674
      %v679 = vsel %vm354, %v674, %v670
      %v681 = vrot.slane %v609, 4
      %v682 = vrot.slane %v606, 4
      %v683 = vrot.slane %v607, 4
      %v688 = vrot.slane %v633, 4
      %v689 = vrot.slane %v630, 4
      %v690 = vrot.slane %v631, 4
      %v695 = vrot.slane %v640, 4
      %v696 = vrot.slane %v641, 4
      %v697 = vrot.slane %v644, 4
      %v702 = vrot.slane %v664, 4
      %v703 = vrot.slane %v665, 4
      %v704 = vrot.slane %v668, 4
      %v708 = vsel %vm389, %v598, %v681
      %v709 = vsel %vm389, %v593, %v682
      %v710 = vsel %vm389, %v594, %v683
      %v711 = vsel %vm389, %v622, %v688
      %v712 = vsel %vm389, %v617, %v689
      %v713 = vsel %vm389, %v618, %v690
      %v714 = vsel %vm389, %v580, %v695
      %v715 = vsel %vm389, %v581, %v696
      %v716 = vsel %vm389, %v582, %v697
      %v717 = vsel %vm389, %v651, %v702
      %v718 = vsel %vm389, %v652, %v703
      %v719 = vsel %vm389, %v657, %v704
      %v720 = vld [vmem:[%s3] sm:$0xf]
      %v721 = vld [vmem:[%s4] sm:$0xf]
      %723 = vset.pattern.permute.xlu0 0
      %724 = vperm.xlu0 %723, %v721
      %v725 = vpop.permute.xlu0 %724
      %v728 = vsel %vm409, %v720, 0
      %v730 = vsel %vm389, %v675, 0
      %v732 = vsel %vm389, %v676, 0
      %v735 = vsel %vm389, %v679, 0
      %737 = vmatprep.subr.mxu0 0.0
      %738 = vmatpush1.msra.mxu0 0.0
      %739 = vmatprep.subr.mxu0 0.0
      %740 = vmatpush1.msra.mxu0 0.0
      %741 = vmatprep.subr.mxu0 0.0
      %742 = vmatpush1.msra.mxu0 0.0
      %743 = vmatprep.subr.mxu0 0.0
      %744 = vmatpush1.msra.mxu0 0.0
      %745 = vmatprep.subr.mxu0 0.0
      %746 = vmatpush1.msra.mxu0 0.0
      %747 = vmatprep.subr.mxu0 0.0
      %748 = vmatpush1.msra.mxu0 0.0
      %749 = vmatprep.subr.mxu0 0.0
      %750 = vmatpush1.msra.mxu0 0.0
      %751 = vmatprep.subr.mxu0 0.0
      %752 = vmatpush1.msra.mxu0 0.0
      %753 = vmatprep.subr.mxu0 0.0
      %754 = vmatpush1.msra.mxu0 0.0
      %755 = vmatprep.subr.mxu0 0.0
      %756 = vmatpush1.msra.mxu0 0.0
      %757 = vmatprep.subr.mxu0 0.0
      %758 = vmatpush1.msra.mxu0 0.0
      %759 = vmatprep.subr.mxu0 %v732
      %760 = vmatpush1.msra.mxu0 %v730
      %761 = vmatprep.subr.mxu0 %v718
      %762 = vmatpush1.msra.mxu0 %v717
      %763 = vmatprep.subr.mxu0 %v715
      %764 = vmatpush1.msra.mxu0 %v714
      %765 = vmatprep.subr.mxu0 %v712
      %766 = vmatpush1.msra.mxu0 %v711
      %767 = vmatprep.subr.mxu0 %v709
      %768 = vmatpush1.msra.mxu0 %v708
      %769 = vmatprep.subr.mxu0 0.0
      %770 = vmatpush2.msra.mxu0 0.0
      %771 = vmatprep.subr.mxu0 0.0
      %772 = vmatpush2.msra.mxu0 0.0
      %773 = vmatprep.subr.mxu0 0.0
      %774 = vmatpush2.msra.mxu0 0.0
      %775 = vmatprep.subr.mxu0 0.0
      %776 = vmatpush2.msra.mxu0 0.0
      %777 = vmatprep.subr.mxu0 0.0
      %778 = vmatpush2.msra.mxu0 0.0
      %779 = vmatprep.subr.mxu0 0.0
      %780 = vmatpush2.msra.mxu0 0.0
      %781 = vmatprep.subr.mxu0 0.0
      %782 = vmatpush2.msra.mxu0 0.0
      %783 = vmatprep.subr.mxu0 0.0
      %784 = vmatpush2.msra.mxu0 0.0
      %785 = vmatprep.subr.mxu0 0.0
      %786 = vmatpush2.msra.mxu0 0.0
      %787 = vmatprep.subr.mxu0 0.0
      %788 = vmatpush2.msra.mxu0 0.0
      %789 = vmatprep.subr.mxu0 0.0
      %790 = vmatpush2.msra.mxu0 0.0
      %791 = vmatprep.subr.mxu0 0.0
      %792 = vmatpush2.msra.mxu0 0.0
      %793 = vmatprep.subr.mxu0 0.0
      %794 = vmatpush2.msra.mxu0 0.0
      %795 = vmatprep.subr.mxu0 0.0
      %796 = vmatpush2.msra.mxu0 0.0
      %797 = vmatprep.subr.mxu0 0.0
      %798 = vmatpush2.msra.mxu0 0.0
      %799 = vmatprep.subr.mxu0 0.0
      %800 = vmatpush2.msra.mxu0 0.0
      %801 = vmatprep.mubr.f32.mxu0 0.0
      %802 = vmatmul.mubr.f32.gmra.mxu0 %v728
      %v803 = vpop.f32.mrf.mxu0
      %v804 = vadd.f32 %v725, %v803
      %v805 = vpop.f32.mrf.mxu0
      %v806 = vadd.f32 %v725, %v805
      %807 = vdwg.mxu0
      %808 = vmatprep.subr.mxu0 0.0
      %809 = vmatpush1.msra.mxu0 0.0
      %810 = vmatprep.subr.mxu0 0.0
      %811 = vmatpush1.msra.mxu0 0.0
      %812 = vmatprep.subr.mxu0 0.0
      %813 = vmatpush1.msra.mxu0 0.0
      %814 = vmatprep.subr.mxu0 0.0
      %815 = vmatpush1.msra.mxu0 0.0
      %816 = vmatprep.subr.mxu0 0.0
      %817 = vmatpush1.msra.mxu0 0.0
      %818 = vmatprep.subr.mxu0 0.0
      %819 = vmatpush1.msra.mxu0 0.0
      %820 = vmatprep.subr.mxu0 0.0
      %821 = vmatpush1.msra.mxu0 0.0
      %822 = vmatprep.subr.mxu0 0.0
      %823 = vmatpush1.msra.mxu0 0.0
      %824 = vmatprep.subr.mxu0 0.0
      %825 = vmatpush1.msra.mxu0 0.0
      %826 = vmatprep.subr.mxu0 0.0
      %827 = vmatpush1.msra.mxu0 0.0
      %828 = vmatprep.subr.mxu0 0.0
      %829 = vmatpush1.msra.mxu0 0.0
      %830 = vmatprep.subr.mxu0 0.0
      %831 = vmatpush1.msra.mxu0 %v735
      %832 = vmatprep.subr.mxu0 0.0
      %833 = vmatpush1.msra.mxu0 %v719
      %834 = vmatprep.subr.mxu0 0.0
      %835 = vmatpush1.msra.mxu0 %v716
      %836 = vmatprep.subr.mxu0 0.0
      %837 = vmatpush1.msra.mxu0 %v713
      %838 = vmatprep.subr.mxu0 0.0
      %839 = vmatpush1.msra.mxu0 %v710
      %840 = vmatprep.subr.mxu0 0.0
      %841 = vmatpush2.msra.mxu0 0.0
      %842 = vmatprep.subr.mxu0 0.0
      %843 = vmatpush2.msra.mxu0 0.0
      %844 = vmatprep.subr.mxu0 0.0
      %845 = vmatpush2.msra.mxu0 0.0
      %846 = vmatprep.subr.mxu0 0.0
      %847 = vmatpush2.msra.mxu0 0.0
      %848 = vmatprep.subr.mxu0 0.0
      %849 = vmatpush2.msra.mxu0 0.0
      %850 = vmatprep.subr.mxu0 0.0
      %851 = vmatpush2.msra.mxu0 0.0
      %852 = vmatprep.subr.mxu0 0.0
      %853 = vmatpush2.msra.mxu0 0.0
      %854 = vmatprep.subr.mxu0 0.0
      %855 = vmatpush2.msra.mxu0 0.0
      %856 = vmatprep.subr.mxu0 0.0
      %857 = vmatpush2.msra.mxu0 0.0
      %858 = vmatprep.subr.mxu0 0.0
      %859 = vmatpush2.msra.mxu0 0.0
      %860 = vmatprep.subr.mxu0 0.0
      %861 = vmatpush2.msra.mxu0 0.0
      %862 = vmatprep.subr.mxu0 0.0
      %863 = vmatpush2.msra.mxu0 0.0
      %864 = vmatprep.subr.mxu0 0.0
      %865 = vmatpush2.msra.mxu0 0.0
      %866 = vmatprep.subr.mxu0 0.0
      %867 = vmatpush2.msra.mxu0 0.0
      %868 = vmatprep.subr.mxu0 0.0
      %869 = vmatpush2.msra.mxu0 0.0
      %870 = vmatprep.subr.mxu0 0.0
      %871 = vmatpush2.msra.mxu0 0.0
      %872 = vmatprep.mubr.f32.mxu0 0.0
      %873 = vmatmul.mubr.f32.gmra.mxu0 %v728
      %v874 = vpop.f32.mrf.mxu0
      %v875 = vadd.f32 %v725, %v874
      %v876 = vpop.f32.mrf.mxu0
      %877 = vdwg.mxu0
      %v878 = vadd.f32 %v804, %v252
      %v879 = vadd.f32 %v806, %v260
      %v880 = vadd.f32 %v875, %v253
      %v883 = vcombine.low %v878, %v879
      %885 = vst [vmem:[%s251] sm:$0xff] %v883
      %886 = vst [vmem:[%s251 + $0x8] sm:$0xf] %v880
      %p887 = scmp.lt.s32.totalorder %s17, 1
      %s888 = scalar_select %p887, %s17, 1
      %s889 = smul.addr %s888, 3
      %s890 = smul.addr %s889, 4
      %s891 = scalar_lea.vmem %s6, %s890
      // Predicated region
      $region45: #{resblock_forward.1} parent=43 // pred_check
        %p892 = pneg %p166
      $region46: #{resblock_forward.1} parent=43 // pred_check_branch
        %894 = sbr.rel (%p892) target = $region48
      $region47: #{resblock_forward.1} parent=43 // pred_region
        _
      $region48: #{resblock_forward.1} parent=43 // pred_fallthru
        _
    $region44: #{resblock_forward.1} parent=5 // pred_fallthru
      _
    %p895 = scmp.le.s32.totalorder 2, %s12
    // Predicated region
    $region49: #{resblock_forward.1} parent=5 // pred_check
      %p896 = pneg %p895
    $region50: #{resblock_forward.1} parent=5 // pred_check_branch
      %898 = sbr.rel (%p896) target = $region52
    $region51: #{resblock_forward.1} parent=5 // pred_region
      %s899 = ssub.s32 %s12, 2
      // Predicated region
      $region53: #{resblock_forward.1} parent=51 // pred_check
        %p900 = pneg %p172
      $region54: #{resblock_forward.1} parent=51 // pred_check_branch
        %902 = sbr.rel (%p900) target = $region56
      $region55: #{resblock_forward.1} parent=51 // pred_region
        %p903 = scmp.lt.s32.totalorder %s18, 1
        %s904 = scalar_select %p903, %s18, 1
        %s905 = smul.addr %s904, 3
        %s906 = smul.addr %s905, 4
        %s907 = scalar_lea.vmem %s6, %s906
      $region56: #{resblock_forward.1} parent=51 // pred_fallthru
        _
    $region52: #{resblock_forward.1} parent=5 // pred_fallthru
      _
  $region6: #{resblock_forward.1} parent=0 // loop_footer
    %s16 = sadd.s32 1, %s12
  $region7: #{resblock_forward.1} parent=0 // loop_footer_branch
    %11 = sbr.rel target = $region3
  $region8: #{resblock_forward.1} parent=0 // loop_exit
    _

</llo_original>
